<compile_context>
chip_gen: v7x
topology: tpu7x:2x2x1
jax: 0.10.0
libtpu: 0.0.40
codegen_flags: <defaults>
</compile_context>

<pallas_src>
import jax
import jax.numpy as jnp
from jax.experimental import pallas as pl
from jax.experimental.pallas import tpu as pltpu


_LANE = 128      # TPU lane width (last dim)
_SUBLANE = 8     # TPU sublane width (second-to-last dim, f32)


def _round_up(x, m):
    return ((x + m - 1) // m) * m


def _mlp_drift_kernel(x_ref, w1_ref, b1_ref, w2_ref, b2_ref, o_ref):
    """Fused MLP drift on one batch tile: o = tanh(x @ W1 + b1) @ W2 + b2."""
    # Hoist bias loads once (JAX does not CSE broadcast_in_dim).
    b1 = b1_ref[...].astype(jnp.float32)
    b2 = b2_ref[...].astype(jnp.float32)

    x = x_ref[...]
    # Layer 1: MXU matmul (operands already in the compute dtype), f32 accumulate.
    h = jnp.dot(x, w1_ref[...], preferred_element_type=jnp.float32)
    h = jnp.tanh(h + b1)                       # EUP transcendental
    h = h.astype(w2_ref.dtype)                 # back to MXU compute dtype (no-op for f32)
    # Layer 2: MXU matmul, f32 accumulate, bias add.
    o = jnp.dot(h, w2_ref[...], preferred_element_type=jnp.float32) + b2
    o_ref[...] = o.astype(o_ref.dtype)


def make_ode_func(w1, b1, w2, b2, *,
                  compute_dtype=jnp.float32,
                  max_block_b=512,
                  vmem_limit_bytes=32 * 1024 * 1024):
    """Return func(x) computing the fused MLP drift with a tiled Pallas kernel.

    compute_dtype: dtype fed to the MXU (jnp.float32 or jnp.bfloat16).
    """
    D, H = w1.shape
    assert w2.shape == (H, D), (w2.shape, (H, D))
    b1 = jnp.reshape(b1, (1, H))
    b2 = jnp.reshape(b2, (1, D))

    # Lane-dense padded feature dims (multiples of 128 -> unmasked vst, full MXU N).
    Dp = _round_up(D, _LANE)
    Hp = _round_up(H, _LANE)

    # Zero-pad parameters once, outside the kernel.
    cdt = jnp.dtype(compute_dtype)
    w1p = jnp.zeros((Dp, Hp), compute_dtype).at[:D, :H].set(w1.astype(compute_dtype))
    w2p = jnp.zeros((Hp, Dp), compute_dtype).at[:H, :D].set(w2.astype(compute_dtype))
    b1p = jnp.zeros((1, Hp), jnp.float32).at[:, :H].set(b1.astype(jnp.float32))
    b2p = jnp.zeros((1, Dp), jnp.float32).at[:, :D].set(b2.astype(jnp.float32))

    param_bytes = (w1p.size + w2p.size) * cdt.itemsize + (b1p.size + b2p.size) * 4

    @jax.jit
    def func(x):
        B, Dx = x.shape
        assert Dx == D, (Dx, D)
        out_dtype = x.dtype

        # Pick the batch tile: largest multiple of 8 rows such that the resident
        # weights plus the double-buffered in/out tiles fit half the VMEM budget.
        bytes_per_row = 2 * 2 * Dp * 4            # (x tile + out tile) x 2 buffers, f32 bound
        budget = max(vmem_limit_bytes // 2 - param_bytes, _SUBLANE * bytes_per_row)
        tb_cap = max(_SUBLANE, (budget // bytes_per_row) // _SUBLANE * _SUBLANE)
        block_b = int(min(max_block_b, tb_cap, _round_up(B, _SUBLANE)))
        block_b = max(_SUBLANE, (block_b // _SUBLANE) * _SUBLANE)

        Bp = _round_up(B, block_b)

        # Pad the state to (Bp, Dp) (only if needed) and cast to the compute dtype.
        xc = x.astype(compute_dtype)
        if Bp != B or Dp != D:
            xp = jnp.zeros((Bp, Dp), compute_dtype).at[:B, :D].set(xc)
        else:
            xp = xc

        out = pl.pallas_call(
            _mlp_drift_kernel,
            out_shape=jax.ShapeDtypeStruct((Bp, Dp), out_dtype),
            grid_spec=pltpu.PrefetchScalarGridSpec(
                num_scalar_prefetch=0,
                grid=(Bp // block_b,),
                in_specs=[
                    pl.BlockSpec((block_b, Dp), lambda i: (i, 0)),   # x tile (pipelined)
                    pl.BlockSpec((Dp, Hp), lambda i: (0, 0)),        # W1 (VMEM-resident)
                    pl.BlockSpec((1, Hp), lambda i: (0, 0)),         # b1
                    pl.BlockSpec((Hp, Dp), lambda i: (0, 0)),        # W2 (VMEM-resident)
                    pl.BlockSpec((1, Dp), lambda i: (0, 0)),         # b2
                ],
                out_specs=pl.BlockSpec((block_b, Dp), lambda i: (i, 0)),
            ),
            compiler_params=pltpu.CompilerParams(
                dimension_semantics=("parallel",),   # megacore sharding on v7x
                vmem_limit_bytes=vmem_limit_bytes,
            ),
        )(xp, w1p, b1p, w2p, b2p)

        # Strip padding (batch rows and lane padding).
        if Bp != B or Dp != D:
            out = out[:B, :D]
        return out

    return func


class ODEwrapperNoTime:
    """JAX/Pallas port of the PyTorch ODEwrapperNoTime: forward(t, x) = func(x)."""

    def __init__(self, func):
        self.func = func

    def __call__(self, t, x):
        del t  # time is ignored, matching the PyTorch module semantics
        return self.func(x)


def _reference_drift(x, w1, b1, w2, b2):
    h = jnp.tanh(x.astype(jnp.float32) @ w1 + b1)
    return (h @ w2 + b2).astype(x.dtype)


if __name__ == "__main__":
    key = jax.random.PRNGKey(0)
    k_x, k_w1, k_b1, k_w2, k_b2 = jax.random.split(key, 5)

    B, D, H = 8, 32, 64  # batch of cells, state dim, hidden dim

    x = jax.random.normal(k_x, (B, D), dtype=jnp.float32)
    w1 = jax.random.normal(k_w1, (D, H), dtype=jnp.float32) * 0.1
    b1 = jax.random.normal(k_b1, (1, H), dtype=jnp.float32) * 0.01
    w2 = jax.random.normal(k_w2, (H, D), dtype=jnp.float32) * 0.1
    b2 = jax.random.normal(k_b2, (1, D), dtype=jnp.float32) * 0.01

    ref = _reference_drift(x, w1, b1, w2, b2)
    t = jnp.float32(0.0)  # ignored by the wrapper

    # --- f32 MXU path (tight check) ---
    ode_f32 = ODEwrapperNoTime(make_ode_func(w1, b1, w2, b2,
                                             compute_dtype=jnp.float32))
    dxdt = jax.block_until_ready(ode_f32(t, x))
    assert dxdt.shape == (B, D), dxdt.shape
    assert jnp.allclose(dxdt, ref, atol=1e-5, rtol=1e-5), "f32 mismatch vs reference"

    # --- bf16 MXU path (fast path for v5e/v6e/v7x; looser tolerance) ---
    ode_bf16 = ODEwrapperNoTime(make_ode_func(w1, b1, w2, b2,
                                              compute_dtype=jnp.bfloat16))
    dxdt_bf16 = jax.block_until_ready(ode_bf16(t, x))
    assert dxdt_bf16.shape == (B, D), dxdt_bf16.shape
    assert jnp.allclose(dxdt_bf16, ref, atol=5e-2, rtol=5e-2), "bf16 mismatch vs reference"

    print("KERNEL_OK")
</pallas_src>

<mosaic_0001>
module attributes {stable_mosaic.version = 11 : i64} {
  func.func @_mlp_drift_kernel(%arg0: i32, %arg1: memref<8x128xf32, #tpu.memory_space<vmem>>, %arg2: memref<128x128xf32, #tpu.memory_space<vmem>>, %arg3: memref<1x128xf32, #tpu.memory_space<vmem>>, %arg4: memref<128x128xf32, #tpu.memory_space<vmem>>, %arg5: memref<1x128xf32, #tpu.memory_space<vmem>>, %arg6: memref<8x128xf32, #tpu.memory_space<vmem>>) attributes {dimension_semantics = [#tpu.dimension_semantics<parallel>], iteration_bounds = array<i64: 1>, scalar_prefetch = 0 : i64, scratch_operands = 0 : i64, tpu.core_type = #tpu.core_type<tc>, window_params = [{transform_indices = @transform_0, window_bounds = array<i64: 8, 128>}, {pipeline_mode = #tpu.pipeline_mode<synchronous>, transform_indices = @transform_1, window_bounds = array<i64: 128, 128>}, {pipeline_mode = #tpu.pipeline_mode<synchronous>, transform_indices = @transform_2, window_bounds = array<i64: 1, 128>}, {pipeline_mode = #tpu.pipeline_mode<synchronous>, transform_indices = @transform_3, window_bounds = array<i64: 128, 128>}, {pipeline_mode = #tpu.pipeline_mode<synchronous>, transform_indices = @transform_4, window_bounds = array<i64: 1, 128>}, {transform_indices = @transform_5, window_bounds = array<i64: 8, 128>}]} {
    %c0 = arith.constant 0 : index
    %c0_0 = arith.constant 0 : index
    %0 = vector.load %arg3[%c0, %c0_0] : memref<1x128xf32, #tpu.memory_space<vmem>>, vector<1x128xf32>
    %c0_1 = arith.constant 0 : index
    %c0_2 = arith.constant 0 : index
    %1 = vector.load %arg5[%c0_1, %c0_2] : memref<1x128xf32, #tpu.memory_space<vmem>>, vector<1x128xf32>
    %c0_3 = arith.constant 0 : index
    %c0_4 = arith.constant 0 : index
    %2 = vector.load %arg1[%c0_3, %c0_4] : memref<8x128xf32, #tpu.memory_space<vmem>>, vector<8x128xf32>
    %c0_5 = arith.constant 0 : index
    %c0_6 = arith.constant 0 : index
    %3 = vector.load %arg2[%c0_5, %c0_6] : memref<128x128xf32, #tpu.memory_space<vmem>>, vector<128x128xf32>
    %cst = arith.constant dense<0.000000e+00> : vector<8x128xf32>
    %4 = tpu.matmul %2, %3, %cst {dimension_numbers = #tpu.dot_dimension_numbers<[1], [0], [0], [1], [0, 0, 1, 1], [], []>} : vector<8x128xf32>, vector<128x128xf32>, vector<8x128xf32> -> vector<8x128xf32>
    %5 = vector.broadcast %0 : vector<1x128xf32> to vector<8x128xf32>
    %6 = arith.addf %4, %5 : vector<8x128xf32>
    %7 = math.tanh %6 : vector<8x128xf32>
    %c0_7 = arith.constant 0 : index
    %c0_8 = arith.constant 0 : index
    %8 = vector.load %arg4[%c0_7, %c0_8] : memref<128x128xf32, #tpu.memory_space<vmem>>, vector<128x128xf32>
    %cst_9 = arith.constant dense<0.000000e+00> : vector<8x128xf32>
    %9 = tpu.matmul %7, %8, %cst_9 {dimension_numbers = #tpu.dot_dimension_numbers<[1], [0], [0], [1], [0, 0, 1, 1], [], []>} : vector<8x128xf32>, vector<128x128xf32>, vector<8x128xf32> -> vector<8x128xf32>
    %10 = vector.broadcast %1 : vector<1x128xf32> to vector<8x128xf32>
    %11 = arith.addf %9, %10 : vector<8x128xf32>
    %c0_10 = arith.constant 0 : index
    %c0_11 = arith.constant 0 : index
    %12 = vector.load %arg6[%c0_10, %c0_11] : memref<8x128xf32, #tpu.memory_space<vmem>>, vector<8x128xf32>
    tpu.vector_store %arg6[%c0_10, %c0_11], %11 {strides = array<i32>} : memref<8x128xf32, #tpu.memory_space<vmem>>, vector<8x128xf32>,
    return
  }
  func.func @transform_0(%arg0: i32) -> (i32, i32) {
    %c0_i32 = arith.constant 0 : i32
    %c0_i32_0 = arith.constant 0 : i32
    return %arg0, %c0_i32 : i32, i32
  }
  func.func @transform_1(%arg0: i32) -> (i32, i32) {
    %c0_i32 = arith.constant 0 : i32
    %c0_i32_0 = arith.constant 0 : i32
    %c0_i32_1 = arith.constant 0 : i32
    return %c0_i32, %c0_i32_0 : i32, i32
  }
  func.func @transform_2(%arg0: i32) -> (i32, i32) {
    %c0_i32 = arith.constant 0 : i32
    %c0_i32_0 = arith.constant 0 : i32
    %c0_i32_1 = arith.constant 0 : i32
    return %c0_i32, %c0_i32_0 : i32, i32
  }
  func.func @transform_3(%arg0: i32) -> (i32, i32) {
    %c0_i32 = arith.constant 0 : i32
    %c0_i32_0 = arith.constant 0 : i32
    %c0_i32_1 = arith.constant 0 : i32
    return %c0_i32, %c0_i32_0 : i32, i32
  }
  func.func @transform_4(%arg0: i32) -> (i32, i32) {
    %c0_i32 = arith.constant 0 : i32
    %c0_i32_0 = arith.constant 0 : i32
    %c0_i32_1 = arith.constant 0 : i32
    return %c0_i32, %c0_i32_0 : i32, i32
  }
  func.func @transform_5(%arg0: i32) -> (i32, i32) {
    %c0_i32 = arith.constant 0 : i32
    %c0_i32_0 = arith.constant 0 : i32
    return %arg0, %c0_i32 : i32, i32
  }
}

</mosaic_0001>

<llo_original>
// kernel: func.1
$region0: #{func.1}
  #allocation0 [shape = 'u32[]', space=smem, size = 0x4, offset = 0x4, fixed_abs, tag = 'smem constant byte address 0x4 - core index']
  #allocation1 [shape = 'u32[144,128]{1,0:T(1,128)}', space=vmem, size = 0x12000, scoped, tag = 'internal scratch']
  %s0 = inlined_call_operand.vmem [shape: f32[8,128], index: 0, kind: input, shape index: {}]
  %s1 = inlined_call_operand.hbm [shape: f32[128,128], index: 1, kind: input, shape index: {}]
  %s2 = inlined_call_operand.vmem [shape: f32[1,128], index: 2, kind: input, shape index: {}]
  %s3 = inlined_call_operand.hbm [shape: f32[128,128], index: 3, kind: input, shape index: {}]
  %s4 = inlined_call_operand.vmem [shape: f32[1,128], index: 4, kind: input, shape index: {}]
  %s5 = inlined_call_operand.hbm [shape: f32[8,128], index: 5, kind: output, shape index: {}]
  %s6 = sld [smem:[#allocation0]]
  $region38: #{func.1} parent=0
    _
  %s8 = ssub.s32 1, %s6
  %s9 = scalar_select 0, %s8, %s6
  $region1: #{func.1} parent=0
    #allocation2 [shape = 'u8[65536]{0}', space=vmem, size = 0x10000, scoped, tag = 'input window, operand 1, single buffered']
    #allocation3 [shape = 's32[1]{0}', space=sflag, size = 0x4, scoped, tag = 'scoped memory for func.1']
    #allocation4 [shape = 's32[1]{0}', space=sflag, size = 0x4, scoped, tag = 'scoped memory for func.1']
    #allocation5 [shape = 'u8[65536]{0}', space=vmem, size = 0x10000, scoped, tag = 'input window, operand 3, single buffered']
    #allocation6 [shape = 's32[1]{0}', space=sflag, size = 0x4, scoped, tag = 'scoped memory for func.1']
    #allocation7 [shape = 'u8[4096]{0}', space=vmem, size = 0x1000, scoped, tag = 'output window, operand 0, single buffered']
    %10 = vsyncpa [#allocation3], 0
    %11 = vsyncpa [#allocation6], 0
    %12 = vsyncpa [#allocation4], 0
    // Predicated region
    $region2: #{func.1} parent=1 // pred_check
      _
    $region3: #{func.1} parent=1 // pred_check_branch
      %14 = sbr.rel (0) target = $region5
    $region4: #{func.1} parent=1 // pred_region
      _
    $region5: #{func.1} parent=1 // pred_fallthru
      _
    // Predicated region
    $region6: #{func.1} parent=1 // pred_check
      _
    $region7: #{func.1} parent=1 // pred_check_branch
      %16 = sbr.rel (0) target = $region9
    $region8: #{func.1} parent=1 // pred_region
      %s18 = ssub.s32 2048, 2048
      %19 = vsyncadd [#allocation3], %s18
      %s20 = sshll.u32 [#allocation2], 4
      %s21 = int_to_ptr.vmem [resolvable:$true] %s20
      %26 = dma.hbm_to_vmem [thread:$0]  %s1, 2048, %s21, [#allocation3], 128, 128, 8
    $region9: #{func.1} parent=1 // pred_fallthru
      _
    // Predicated region
    $region10: #{func.1} parent=1 // pred_check
      _
    $region11: #{func.1} parent=1 // pred_check_branch
      %28 = sbr.rel (0) target = $region13
    $region12: #{func.1} parent=1 // pred_region
      _
    $region13: #{func.1} parent=1 // pred_fallthru
      _
    // Predicated region
    $region14: #{func.1} parent=1 // pred_check
      _
    $region15: #{func.1} parent=1 // pred_check_branch
      %30 = sbr.rel (0) target = $region17
    $region16: #{func.1} parent=1 // pred_region
      %s32 = ssub.s32 2048, 2048
      %33 = vsyncadd [#allocation6], %s32
      %s34 = sshll.u32 [#allocation5], 4
      %s35 = int_to_ptr.vmem [resolvable:$true] %s34
      %40 = dma.hbm_to_vmem [thread:$0]  %s3, 2048, %s35, [#allocation6], 128, 128, 8
    $region17: #{func.1} parent=1 // pred_fallthru
      _
    // Predicated region
    $region18: #{func.1} parent=1 // pred_check
      _
    $region19: #{func.1} parent=1 // pred_check_branch
      %42 = sbr.rel (0) target = $region21
    $region20: #{func.1} parent=1 // pred_region
      _
    $region21: #{func.1} parent=1 // pred_fallthru
      _
    // Predicated region
    $region22: #{func.1} parent=1 // pred_check
      _
    $region23: #{func.1} parent=1 // pred_check_branch
      %44 = sbr.rel (0) target = $region25
    $region24: #{func.1} parent=1 // pred_region
      %45 = dma.done [#allocation3], 2048
    $region25: #{func.1} parent=1 // pred_fallthru
      _
    // Predicated region
    $region26: #{func.1} parent=1 // pred_check
      _
    $region27: #{func.1} parent=1 // pred_check_branch
      %47 = sbr.rel (0) target = $region29
    $region28: #{func.1} parent=1 // pred_region
      %48 = dma.done [#allocation6], 2048
    $region29: #{func.1} parent=1 // pred_fallthru
      _
    %v49 = vld [vmem:[%s2] sm:$0x1]
    %v50 = vld [vmem:[%s4] sm:$0x1]
    %v51 = vld [vmem:[%s0] sm:$0xff]
    %v52 = vld [vmem:[#allocation2] sm:$0xff]
    %v53 = vld [vmem:[#allocation2 + $0x8] sm:$0xff]
    %v54 = vld [vmem:[#allocation2 + $0x10] sm:$0xff]
    %v55 = vld [vmem:[#allocation2 + $0x18] sm:$0xff]
    %v56 = vld [vmem:[#allocation2 + $0x20] sm:$0xff]
    %v57 = vld [vmem:[#allocation2 + $0x28] sm:$0xff]
    %v58 = vld [vmem:[#allocation2 + $0x30] sm:$0xff]
    %v59 = vld [vmem:[#allocation2 + $0x38] sm:$0xff]
    %v60 = vld [vmem:[#allocation2 + $0x40] sm:$0xff]
    %v61 = vld [vmem:[#allocation2 + $0x48] sm:$0xff]
    %v62 = vld [vmem:[#allocation2 + $0x50] sm:$0xff]
    %v63 = vld [vmem:[#allocation2 + $0x58] sm:$0xff]
    %v64 = vld [vmem:[#allocation2 + $0x60] sm:$0xff]
    %v65 = vld [vmem:[#allocation2 + $0x68] sm:$0xff]
    %v66 = vld [vmem:[#allocation2 + $0x70] sm:$0xff]
    %v67 = vld [vmem:[#allocation2 + $0x78] sm:$0xff]
    %v69 = vlaneseq
    %v70 = vshrl.u32 %v69, 7
    %v71 = vsub.s32 0, %v70
    %v72 = vrot.slane %v49, %v71
    %74 = vmatprep.subr.mxu0 0.0
    %75 = vmatpush1.msra.mxu0 %v52
    %76 = vmatprep.subr.mxu0 0.0
    %77 = vmatpush1.msra.mxu0 %v53
    %78 = vmatprep.subr.mxu0 0.0
    %79 = vmatpush1.msra.mxu0 %v54
    %80 = vmatprep.subr.mxu0 0.0
    %81 = vmatpush1.msra.mxu0 %v55
    %82 = vmatprep.subr.mxu0 0.0
    %83 = vmatpush1.msra.mxu0 %v56
    %84 = vmatprep.subr.mxu0 0.0
    %85 = vmatpush1.msra.mxu0 %v57
    %86 = vmatprep.subr.mxu0 0.0
    %87 = vmatpush1.msra.mxu0 %v58
    %88 = vmatprep.subr.mxu0 0.0
    %89 = vmatpush1.msra.mxu0 %v59
    %90 = vmatprep.subr.mxu0 0.0
    %91 = vmatpush1.msra.mxu0 %v60
    %92 = vmatprep.subr.mxu0 0.0
    %93 = vmatpush1.msra.mxu0 %v61
    %94 = vmatprep.subr.mxu0 0.0
    %95 = vmatpush1.msra.mxu0 %v62
    %96 = vmatprep.subr.mxu0 0.0
    %97 = vmatpush1.msra.mxu0 %v63
    %98 = vmatprep.subr.mxu0 0.0
    %99 = vmatpush1.msra.mxu0 %v64
    %100 = vmatprep.subr.mxu0 0.0
    %101 = vmatpush1.msra.mxu0 %v65
    %102 = vmatprep.subr.mxu0 0.0
    %103 = vmatpush1.msra.mxu0 %v66
    %104 = vmatprep.subr.mxu0 0.0
    %105 = vmatpush1.msra.mxu0 %v67
    %106 = vmatprep.subr.mxu0 0.0
    %107 = vmatpush1.msra.mxu0 0.0
    %108 = vmatprep.subr.mxu0 0.0
    %109 = vmatpush1.msra.mxu0 0.0
    %110 = vmatprep.subr.mxu0 0.0
    %111 = vmatpush1.msra.mxu0 0.0
    %112 = vmatprep.subr.mxu0 0.0
    %113 = vmatpush1.msra.mxu0 0.0
    %114 = vmatprep.subr.mxu0 0.0
    %115 = vmatpush1.msra.mxu0 0.0
    %116 = vmatprep.subr.mxu0 0.0
    %117 = vmatpush1.msra.mxu0 0.0
    %118 = vmatprep.subr.mxu0 0.0
    %119 = vmatpush1.msra.mxu0 0.0
    %120 = vmatprep.subr.mxu0 0.0
    %121 = vmatpush1.msra.mxu0 0.0
    %122 = vmatprep.subr.mxu0 0.0
    %123 = vmatpush1.msra.mxu0 0.0
    %124 = vmatprep.subr.mxu0 0.0
    %125 = vmatpush1.msra.mxu0 0.0
    %126 = vmatprep.subr.mxu0 0.0
    %127 = vmatpush1.msra.mxu0 0.0
    %128 = vmatprep.subr.mxu0 0.0
    %129 = vmatpush1.msra.mxu0 0.0
    %130 = vmatprep.subr.mxu0 0.0
    %131 = vmatpush1.msra.mxu0 0.0
    %132 = vmatprep.subr.mxu0 0.0
    %133 = vmatpush1.msra.mxu0 0.0
    %134 = vmatprep.subr.mxu0 0.0
    %135 = vmatpush1.msra.mxu0 0.0
    %136 = vmatprep.subr.mxu0 0.0
    %137 = vmatpush1.msra.mxu0 0.0
    %138 = vmatprep.mubr.f32.mxu0 0.0
    %139 = vmatmul.mubr.f32.gmra.mrb[0].mxu0 %v51
    %v140 = vpop.f32.mrb[0].mxu0
    %v141 = vadd.f32 %v72, %v140
    %v142 = vpop.f32.mrb[0].mxu0
    %143 = vdwg.mxu0
    %v144 = vtanh.pop %v141
    %v145 = vld [vmem:[#allocation5] sm:$0xff]
    %v146 = vld [vmem:[#allocation5 + $0x8] sm:$0xff]
    %v147 = vld [vmem:[#allocation5 + $0x10] sm:$0xff]
    %v148 = vld [vmem:[#allocation5 + $0x18] sm:$0xff]
    %v149 = vld [vmem:[#allocation5 + $0x20] sm:$0xff]
    %v150 = vld [vmem:[#allocation5 + $0x28] sm:$0xff]
    %v151 = vld [vmem:[#allocation5 + $0x30] sm:$0xff]
    %v152 = vld [vmem:[#allocation5 + $0x38] sm:$0xff]
    %v153 = vld [vmem:[#allocation5 + $0x40] sm:$0xff]
    %v154 = vld [vmem:[#allocation5 + $0x48] sm:$0xff]
    %v155 = vld [vmem:[#allocation5 + $0x50] sm:$0xff]
    %v156 = vld [vmem:[#allocation5 + $0x58] sm:$0xff]
    %v157 = vld [vmem:[#allocation5 + $0x60] sm:$0xff]
    %v158 = vld [vmem:[#allocation5 + $0x68] sm:$0xff]
    %v159 = vld [vmem:[#allocation5 + $0x70] sm:$0xff]
    %v160 = vld [vmem:[#allocation5 + $0x78] sm:$0xff]
    %v162 = vlaneseq
    %v163 = vshrl.u32 %v162, 7
    %v164 = vsub.s32 0, %v163
    %v165 = vrot.slane %v50, %v164
    %167 = vmatprep.subr.mxu0 0.0
    %168 = vmatpush1.msra.mxu0 %v145
    %169 = vmatprep.subr.mxu0 0.0
    %170 = vmatpush1.msra.mxu0 %v146
    %171 = vmatprep.subr.mxu0 0.0
    %172 = vmatpush1.msra.mxu0 %v147
    %173 = vmatprep.subr.mxu0 0.0
    %174 = vmatpush1.msra.mxu0 %v148
    %175 = vmatprep.subr.mxu0 0.0
    %176 = vmatpush1.msra.mxu0 %v149
    %177 = vmatprep.subr.mxu0 0.0
    %178 = vmatpush1.msra.mxu0 %v150
    %179 = vmatprep.subr.mxu0 0.0
    %180 = vmatpush1.msra.mxu0 %v151
    %181 = vmatprep.subr.mxu0 0.0
    %182 = vmatpush1.msra.mxu0 %v152
    %183 = vmatprep.subr.mxu0 0.0
    %184 = vmatpush1.msra.mxu0 %v153
    %185 = vmatprep.subr.mxu0 0.0
    %186 = vmatpush1.msra.mxu0 %v154
    %187 = vmatprep.subr.mxu0 0.0
    %188 = vmatpush1.msra.mxu0 %v155
    %189 = vmatprep.subr.mxu0 0.0
    %190 = vmatpush1.msra.mxu0 %v156
    %191 = vmatprep.subr.mxu0 0.0
    %192 = vmatpush1.msra.mxu0 %v157
    %193 = vmatprep.subr.mxu0 0.0
    %194 = vmatpush1.msra.mxu0 %v158
    %195 = vmatprep.subr.mxu0 0.0
    %196 = vmatpush1.msra.mxu0 %v159
    %197 = vmatprep.subr.mxu0 0.0
    %198 = vmatpush1.msra.mxu0 %v160
    %199 = vmatprep.subr.mxu0 0.0
    %200 = vmatpush1.msra.mxu0 0.0
    %201 = vmatprep.subr.mxu0 0.0
    %202 = vmatpush1.msra.mxu0 0.0
    %203 = vmatprep.subr.mxu0 0.0
    %204 = vmatpush1.msra.mxu0 0.0
    %205 = vmatprep.subr.mxu0 0.0
    %206 = vmatpush1.msra.mxu0 0.0
    %207 = vmatprep.subr.mxu0 0.0
    %208 = vmatpush1.msra.mxu0 0.0
    %209 = vmatprep.subr.mxu0 0.0
    %210 = vmatpush1.msra.mxu0 0.0
    %211 = vmatprep.subr.mxu0 0.0
    %212 = vmatpush1.msra.mxu0 0.0
    %213 = vmatprep.subr.mxu0 0.0
    %214 = vmatpush1.msra.mxu0 0.0
    %215 = vmatprep.subr.mxu0 0.0
    %216 = vmatpush1.msra.mxu0 0.0
    %217 = vmatprep.subr.mxu0 0.0
    %218 = vmatpush1.msra.mxu0 0.0
    %219 = vmatprep.subr.mxu0 0.0
    %220 = vmatpush1.msra.mxu0 0.0
    %221 = vmatprep.subr.mxu0 0.0
    %222 = vmatpush1.msra.mxu0 0.0
    %223 = vmatprep.subr.mxu0 0.0
    %224 = vmatpush1.msra.mxu0 0.0
    %225 = vmatprep.subr.mxu0 0.0
    %226 = vmatpush1.msra.mxu0 0.0
    %227 = vmatprep.subr.mxu0 0.0
    %228 = vmatpush1.msra.mxu0 0.0
    %229 = vmatprep.subr.mxu0 0.0
    %230 = vmatpush1.msra.mxu0 0.0
    %231 = vmatprep.mubr.f32.mxu0 0.0
    %232 = vmatmul.mubr.f32.gmra.mrb[0].mxu0 %v144
    %v233 = vpop.f32.mrb[0].mxu0
    %v234 = vadd.f32 %v165, %v233
    %v235 = vpop.f32.mrb[0].mxu0
    %236 = vdwg.mxu0
    %237 = vst [vmem:[#allocation7] sm:$0xff] %v234
    // Predicated region
    $region30: #{func.1} parent=1 // pred_check
      _
    $region31: #{func.1} parent=1 // pred_check_branch
      %239 = sbr.rel (0) target = $region33
    $region32: #{func.1} parent=1 // pred_region
      %s241 = ssub.s32 128, 128
      %242 = vsyncadd [#allocation4], %s241
      %s244 = sshll.u32 [#allocation7], 4
      %s245 = int_to_ptr.vmem [resolvable:$true] %s244
      %247 = dma.vmem_to_hbm [thread:$0]  %s245, 128, %s5, [#allocation4]
    $region33: #{func.1} parent=1 // pred_fallthru
      _
    // Predicated region
    $region34: #{func.1} parent=1 // pred_check
      _
    $region35: #{func.1} parent=1 // pred_check_branch
      %249 = sbr.rel (0) target = $region37
    $region36: #{func.1} parent=1 // pred_region
      %250 = dma.done [#allocation4], 128
    $region37: #{func.1} parent=1 // pred_fallthru
      _
    %251 = vsyncpa [#allocation3], 1
    %252 = vsyncpa [#allocation6], 1
    %253 = vsyncpa [#allocation4], 1

</llo_original>
